<compile_context>
chip_gen: v7x
topology: tpu7x:2x2x1
jax: 0.10.0
libtpu: 0.0.40
codegen_flags: <defaults>
</compile_context>

<pallas_src>
import math

import jax
import jax.numpy as jnp
from jax.experimental import pallas as pl
from jax.experimental.pallas import tpu as pltpu


def _round_up(n: int, m: int) -> int:
    return ((n + m - 1) // m) * m


# --------------------------------------------------------------------------
# Kernel body: fused Linear -> ReLU -> Linear -> ReLU -> Linear
# --------------------------------------------------------------------------
def mlp_forecast_kernel(x_ref, w1_ref, b1_ref, w2_ref, b2_ref, w3_ref, b3_ref,
                        o_ref):
    # Layer 1: bf16 operands -> f32 accumulation on the MXU, bias+ReLU in f32.
    h1 = jnp.dot(x_ref[...], w1_ref[...], preferred_element_type=jnp.float32)
    h1 = jnp.maximum(h1 + b1_ref[...], 0.0)
    # Layer 2: Linear + ReLU.  Dropout(0.1) is identity (eval/deterministic).
    h2 = jnp.dot(h1.astype(w2_ref.dtype), w2_ref[...],
                 preferred_element_type=jnp.float32)
    h2 = jnp.maximum(h2 + b2_ref[...], 0.0)
    # Output layer: Linear, no activation.
    out = jnp.dot(h2.astype(w3_ref.dtype), w3_ref[...],
                  preferred_element_type=jnp.float32)
    o_ref[...] = (out + b3_ref[...]).astype(o_ref.dtype)


# --------------------------------------------------------------------------
# One-time parameter preparation (hoisted out of the forward path).
# --------------------------------------------------------------------------
def prepare_params(params):
    """Cast weights to bf16 MXU operands and biases to (1, n) f32 rows. Call once."""
    return {
        "w1": jnp.asarray(params["w1"], jnp.bfloat16),
        "w2": jnp.asarray(params["w2"], jnp.bfloat16),
        "w3": jnp.asarray(params["w3"], jnp.bfloat16),
        "b1": jnp.asarray(params["b1"], jnp.float32).reshape(1, -1),
        "b2": jnp.asarray(params["b2"], jnp.float32).reshape(1, -1),
        "b3": jnp.asarray(params["b3"], jnp.float32).reshape(1, -1),
    }


# --------------------------------------------------------------------------
# Tile selection & VMEM budget
# --------------------------------------------------------------------------
def _vmem_footprint_bytes(tm, in_size, hid, out):
    w = 2 * (in_size * hid + hid * hid + hid * out)   # bf16 weights
    b = 4 * (2 * hid + out)                           # f32 biases
    x_t = 2 * tm * in_size                            # bf16 x tile
    o_t = 4 * tm * out                                # f32 out tile
    inter = 2 * 4 * tm * hid                          # f32 h1/h2 live values
    # Conservatively assume everything is double-buffered.
    return 2 * (w + b + x_t + o_t) + inter


def _pick_tm(batch, in_size, hid, out, tm_max):
    if batch <= 16:
        # Single full-dim block, grid=(1,).  No padding / alignment needed.
        return batch
    # >=2 grid steps when batch allows (feeds both v7x TensorCores), rounded to
    # 16 rows so bf16 sublane packing is dense.
    tm = max(16, min(tm_max, _round_up((batch + 1) // 2, 16)))
    # v7x 64 MiB VMEM guard: shrink tm until the fused layout fits ~48 MiB.
    budget = 48 << 20
    while tm > 16 and _vmem_footprint_bytes(tm, in_size, hid, out) > budget:
        tm = max(16, _round_up(tm // 2, 16))
    return tm


# --------------------------------------------------------------------------
# Forward pass
# --------------------------------------------------------------------------
def mlp_forecast_forward(x, prepared, *, tm_max=256):
    """Forward pass of MLPForecastModel.

    Args:
      x: array of shape (batch, ...) -- flattened to (batch, in_size).
      prepared: output of prepare_params() (bf16 weights, (1,n) f32 biases).
      tm_max: maximum batch tile (256 is a good default on v6e/v7x; 128 is
              enough to saturate the v5e MXU).
    Returns:
      (predictions, None) matching the PyTorch module's forward signature.
    """
    batch = x.shape[0]
    # Single cast, no zero-padded HBM copy of x.
    xb = x.reshape(batch, -1).astype(jnp.bfloat16)
    in_size = xb.shape[1]

    w1, w2, w3 = prepared["w1"], prepared["w2"], prepared["w3"]
    b1, b2, b3 = prepared["b1"], prepared["b2"], prepared["b3"]
    hid_size = w1.shape[1]
    out_size = w3.shape[1]

    tm = _pick_tm(batch, in_size, hid_size, out_size, tm_max)
    grid = (pl.cdiv(batch, tm),)  # partial last block handles the remainder

    # Constant index_map => weights/biases stay VMEM-resident across grid steps.
    const = lambda shape: pl.BlockSpec(shape, lambda i: (0,) * len(shape))

    vmem_limit = int(min(
        max(1.5 * _vmem_footprint_bytes(tm, in_size, hid_size, out_size),
            32 << 20),
        64 << 20))

    preds = pl.pallas_call(
        mlp_forecast_kernel,
        out_shape=jax.ShapeDtypeStruct((batch, out_size), jnp.float32),
        grid=grid,
        in_specs=[
            pl.BlockSpec((tm, in_size), lambda i: (i, 0)),  # batch-tiled input
            const(w1.shape), const(b1.shape),
            const(w2.shape), const(b2.shape),
            const(w3.shape), const(b3.shape),
        ],
        out_specs=pl.BlockSpec((tm, out_size), lambda i: (i, 0)),
        compiler_params=pltpu.CompilerParams(
            dimension_semantics=("parallel",),   # shard batch across v7x TCs
            vmem_limit_bytes=vmem_limit,
        ),
    )(xb, w1, b1, w2, b2, w3, b3)

    return preds, None


# --------------------------------------------------------------------------
# Init matching the module: kaiming_normal_ weights, zero biases.
# --------------------------------------------------------------------------
def init_params(key, in_size, out_size, hid_size):
    def kaiming(k, fan_in, fan_out):
        std = math.sqrt(2.0 / fan_in)  # gain sqrt(2) / sqrt(fan_in)
        # stored as (fan_in, fan_out) == transpose of torch's (out, in)
        return std * jax.random.normal(k, (fan_in, fan_out), dtype=jnp.float32)

    k1, k2, k3 = jax.random.split(key, 3)
    return {
        "w1": kaiming(k1, in_size, hid_size),
        "b1": jnp.zeros((hid_size,), jnp.float32),
        "w2": kaiming(k2, hid_size, hid_size),
        "b2": jnp.zeros((hid_size,), jnp.float32),
        "w3": kaiming(k3, hid_size, out_size),
        "b3": jnp.zeros((out_size,), jnp.float32),
    }


# --------------------------------------------------------------------------
# Self-test
# --------------------------------------------------------------------------
if __name__ == "__main__":

    def run_case(key, batch, c, t, hid_size, out_size):
        kx, kp = jax.random.split(key)
        in_size = c * t
        x = jax.random.normal(kx, (batch, c, t), dtype=jnp.float32)
        params = init_params(kp, in_size, out_size, hid_size)
        prepared = prepare_params(params)

        preds, logvars = mlp_forecast_forward(x, prepared)
        preds = jax.block_until_ready(preds)

        assert preds.shape == (batch, out_size)
        assert logvars is None

        xf = x.reshape(batch, -1)
        # Reference 1: plain-JAX MLP with the same bf16-operand / f32-accumulate
        # recipe (tight tolerance; only summation-order differences remain).
        xbf = xf.astype(jnp.bfloat16)
        h1 = jnp.maximum(
            jnp.dot(xbf, prepared["w1"], preferred_element_type=jnp.float32)
            + params["b1"], 0.0)
        h2 = jnp.maximum(
            jnp.dot(h1.astype(jnp.bfloat16), prepared["w2"],
                    preferred_element_type=jnp.float32) + params["b2"], 0.0)
        ref_bf16 = jnp.dot(h2.astype(jnp.bfloat16), prepared["w3"],
                           preferred_element_type=jnp.float32) + params["b3"]

        # Reference 2: full-f32 MLP (loose tolerance bounding the bf16 cast error).
        h1f = jnp.maximum(xf @ params["w1"] + params["b1"], 0.0)
        h2f = jnp.maximum(h1f @ params["w2"] + params["b2"], 0.0)
        ref_f32 = h2f @ params["w3"] + params["b3"]

        assert jnp.allclose(preds, ref_bf16, atol=2e-3, rtol=2e-3)
        assert jnp.allclose(preds, ref_f32, atol=1e-1, rtol=5e-2)

    key = jax.random.PRNGKey(0)
    k1, k2 = jax.random.split(key)

    # Case 1: small shapes, single full-dim block (gridless path, no padding).
    # batch=2, input (4, 16) -> in_size=64, hid_size=32, out_size=8.
    run_case(k1, batch=2, c=4, t=16, hid_size=32, out_size=8)

    # Case 2: tiled path with a partial last batch block (module-default
    # hid_size=200): batch=100 -> tm=64, grid=(2,), remainder masked on store.
    run_case(k2, batch=100, c=4, t=16, hid_size=200, out_size=8)

    print("KERNEL_OK")
</pallas_src>

<mosaic_0001>
module attributes {stable_mosaic.version = 11 : i64} {
  func.func @mlp_forecast_kernel(%arg0: i32, %arg1: memref<2x64xbf16, #tpu.memory_space<vmem>>, %arg2: memref<64x32xbf16, #tpu.memory_space<vmem>>, %arg3: memref<1x32xf32, #tpu.memory_space<vmem>>, %arg4: memref<32x32xbf16, #tpu.memory_space<vmem>>, %arg5: memref<1x32xf32, #tpu.memory_space<vmem>>, %arg6: memref<32x8xbf16, #tpu.memory_space<vmem>>, %arg7: memref<1x8xf32, #tpu.memory_space<vmem>>, %arg8: memref<2x8xf32, #tpu.memory_space<vmem>>) attributes {dimension_semantics = [#tpu.dimension_semantics<parallel>], iteration_bounds = array<i64: 1>, scalar_prefetch = 0 : i64, scratch_operands = 0 : i64, tpu.core_type = #tpu.core_type<tc>, window_params = [{transform_indices = @transform_0, window_bounds = array<i64: 2, 64>}, {pipeline_mode = #tpu.pipeline_mode<synchronous>, transform_indices = @transform_1, window_bounds = array<i64: 64, 32>}, {pipeline_mode = #tpu.pipeline_mode<synchronous>, transform_indices = @transform_2, window_bounds = array<i64: 1, 32>}, {pipeline_mode = #tpu.pipeline_mode<synchronous>, transform_indices = @transform_3, window_bounds = array<i64: 32, 32>}, {pipeline_mode = #tpu.pipeline_mode<synchronous>, transform_indices = @transform_4, window_bounds = array<i64: 1, 32>}, {pipeline_mode = #tpu.pipeline_mode<synchronous>, transform_indices = @transform_5, window_bounds = array<i64: 32, 8>}, {pipeline_mode = #tpu.pipeline_mode<synchronous>, transform_indices = @transform_6, window_bounds = array<i64: 1, 8>}, {transform_indices = @transform_7, window_bounds = array<i64: 2, 8>}]} {
    %c0 = arith.constant 0 : index
    %c0_0 = arith.constant 0 : index
    %0 = vector.load %arg1[%c0, %c0_0] : memref<2x64xbf16, #tpu.memory_space<vmem>>, vector<2x64xbf16>
    %c0_1 = arith.constant 0 : index
    %c0_2 = arith.constant 0 : index
    %1 = vector.load %arg2[%c0_1, %c0_2] : memref<64x32xbf16, #tpu.memory_space<vmem>>, vector<64x32xbf16>
    %cst = arith.constant dense<0.000000e+00> : vector<2x32xf32>
    %2 = tpu.matmul %0, %1, %cst {dimension_numbers = #tpu.dot_dimension_numbers<[1], [0], [0], [1], [0, 0, 1, 1], [], []>} : vector<2x64xbf16>, vector<64x32xbf16>, vector<2x32xf32> -> vector<2x32xf32>
    %c0_3 = arith.constant 0 : index
    %c0_4 = arith.constant 0 : index
    %3 = vector.load %arg3[%c0_3, %c0_4] : memref<1x32xf32, #tpu.memory_space<vmem>>, vector<1x32xf32>
    %4 = vector.broadcast %3 : vector<1x32xf32> to vector<2x32xf32>
    %5 = arith.addf %2, %4 : vector<2x32xf32>
    %cst_5 = arith.constant 0.000000e+00 : f32
    %6 = vector.broadcast %cst_5 : f32 to vector<2x32xf32>
    %7 = arith.maximumf %5, %6 : vector<2x32xf32>
    %8 = arith.truncf %7 : vector<2x32xf32> to vector<2x32xbf16>
    %c0_6 = arith.constant 0 : index
    %c0_7 = arith.constant 0 : index
    %9 = vector.load %arg4[%c0_6, %c0_7] : memref<32x32xbf16, #tpu.memory_space<vmem>>, vector<32x32xbf16>
    %cst_8 = arith.constant dense<0.000000e+00> : vector<2x32xf32>
    %10 = tpu.matmul %8, %9, %cst_8 {dimension_numbers = #tpu.dot_dimension_numbers<[1], [0], [0], [1], [0, 0, 1, 1], [], []>} : vector<2x32xbf16>, vector<32x32xbf16>, vector<2x32xf32> -> vector<2x32xf32>
    %c0_9 = arith.constant 0 : index
    %c0_10 = arith.constant 0 : index
    %11 = vector.load %arg5[%c0_9, %c0_10] : memref<1x32xf32, #tpu.memory_space<vmem>>, vector<1x32xf32>
    %12 = vector.broadcast %11 : vector<1x32xf32> to vector<2x32xf32>
    %13 = arith.addf %10, %12 : vector<2x32xf32>
    %cst_11 = arith.constant 0.000000e+00 : f32
    %14 = vector.broadcast %cst_11 : f32 to vector<2x32xf32>
    %15 = arith.maximumf %13, %14 : vector<2x32xf32>
    %16 = arith.truncf %15 : vector<2x32xf32> to vector<2x32xbf16>
    %c0_12 = arith.constant 0 : index
    %c0_13 = arith.constant 0 : index
    %17 = vector.load %arg6[%c0_12, %c0_13] : memref<32x8xbf16, #tpu.memory_space<vmem>>, vector<32x8xbf16>
    %cst_14 = arith.constant dense<0.000000e+00> : vector<2x8xf32>
    %18 = tpu.matmul %16, %17, %cst_14 {dimension_numbers = #tpu.dot_dimension_numbers<[1], [0], [0], [1], [0, 0, 1, 1], [], []>} : vector<2x32xbf16>, vector<32x8xbf16>, vector<2x8xf32> -> vector<2x8xf32>
    %c0_15 = arith.constant 0 : index
    %c0_16 = arith.constant 0 : index
    %19 = vector.load %arg7[%c0_15, %c0_16] : memref<1x8xf32, #tpu.memory_space<vmem>>, vector<1x8xf32>
    %20 = vector.broadcast %19 : vector<1x8xf32> to vector<2x8xf32>
    %21 = arith.addf %18, %20 : vector<2x8xf32>
    %c0_17 = arith.constant 0 : index
    %c0_18 = arith.constant 0 : index
    %22 = vector.load %arg8[%c0_17, %c0_18] : memref<2x8xf32, #tpu.memory_space<vmem>>, vector<2x8xf32>
    tpu.vector_store %arg8[%c0_17, %c0_18], %21 {strides = array<i32>} : memref<2x8xf32, #tpu.memory_space<vmem>>, vector<2x8xf32>,
    return
  }
  func.func @transform_0(%arg0: i32) -> (i32, i32) {
    %c0_i32 = arith.constant 0 : i32
    %c0_i32_0 = arith.constant 0 : i32
    return %arg0, %c0_i32 : i32, i32
  }
  func.func @transform_1(%arg0: i32) -> (i32, i32) {
    %c0_i32 = arith.constant 0 : i32
    %c0_i32_0 = arith.constant 0 : i32
    %c0_i32_1 = arith.constant 0 : i32
    return %c0_i32, %c0_i32_0 : i32, i32
  }
  func.func @transform_2(%arg0: i32) -> (i32, i32) {
    %c0_i32 = arith.constant 0 : i32
    %c0_i32_0 = arith.constant 0 : i32
    %c0_i32_1 = arith.constant 0 : i32
    return %c0_i32, %c0_i32_0 : i32, i32
  }
  func.func @transform_3(%arg0: i32) -> (i32, i32) {
    %c0_i32 = arith.constant 0 : i32
    %c0_i32_0 = arith.constant 0 : i32
    %c0_i32_1 = arith.constant 0 : i32
    return %c0_i32, %c0_i32_0 : i32, i32
  }
  func.func @transform_4(%arg0: i32) -> (i32, i32) {
    %c0_i32 = arith.constant 0 : i32
    %c0_i32_0 = arith.constant 0 : i32
    %c0_i32_1 = arith.constant 0 : i32
    return %c0_i32, %c0_i32_0 : i32, i32
  }
  func.func @transform_5(%arg0: i32) -> (i32, i32) {
    %c0_i32 = arith.constant 0 : i32
    %c0_i32_0 = arith.constant 0 : i32
    %c0_i32_1 = arith.constant 0 : i32
    return %c0_i32, %c0_i32_0 : i32, i32
  }
  func.func @transform_6(%arg0: i32) -> (i32, i32) {
    %c0_i32 = arith.constant 0 : i32
    %c0_i32_0 = arith.constant 0 : i32
    %c0_i32_1 = arith.constant 0 : i32
    return %c0_i32, %c0_i32_0 : i32, i32
  }
  func.func @transform_7(%arg0: i32) -> (i32, i32) {
    %c0_i32 = arith.constant 0 : i32
    %c0_i32_0 = arith.constant 0 : i32
    return %arg0, %c0_i32 : i32, i32
  }
}

</mosaic_0001>

<llo_original>
// kernel: tpu_custom_call.1
$region0: #{tpu_custom_call.1}
  #allocation0 [shape = 'u32[]', space=smem, size = 0x4, offset = 0x4, fixed_abs, tag = 'smem constant byte address 0x4 - core index']
  #allocation1 [shape = 'u32[144,128]{1,0:T(1,128)}', space=vmem, size = 0x12000, scoped, tag = 'internal scratch']
  %s0 = inlined_call_operand.vmem [shape: bf16[2,64], index: 0, kind: input, shape index: {}]
  %s1 = inlined_call_operand.vmem [shape: bf16[64,32], index: 1, kind: input, shape index: {}]
  %s2 = inlined_call_operand.vmem [shape: f32[1,32], index: 2, kind: input, shape index: {}]
  %s3 = inlined_call_operand.vmem [shape: bf16[32,32], index: 3, kind: input, shape index: {}]
  %s4 = inlined_call_operand.vmem [shape: f32[1,32], index: 4, kind: input, shape index: {}]
  %s5 = inlined_call_operand.vmem [shape: bf16[32,8], index: 5, kind: input, shape index: {}]
  %s6 = inlined_call_operand.vmem [shape: f32[1,8], index: 6, kind: input, shape index: {}]
  %s7 = inlined_call_operand.hbm [shape: f32[2,8], index: 7, kind: output, shape index: {}]
  %s8 = sld [smem:[#allocation0]]
  $region38: #{tpu_custom_call.1} parent=0
    _
  %s10 = ssub.s32 1, %s8
  %s11 = scalar_select 0, %s10, %s8
  $region1: #{tpu_custom_call.1} parent=0
    #allocation2 [shape = 'u8[1024]{0}', space=vmem, size = 0x400, scoped, tag = 'output window, operand 0, single buffered']
    #allocation3 [shape = 's32[1]{0}', space=sflag, size = 0x4, scoped, tag = 'scoped memory for tpu_custom_call.1']
    %12 = vsyncpa [#allocation3], 0
    // Predicated region
    $region2: #{tpu_custom_call.1} parent=1 // pred_check
      _
    $region3: #{tpu_custom_call.1} parent=1 // pred_check_branch
      %14 = sbr.rel (0) target = $region5
    $region4: #{tpu_custom_call.1} parent=1 // pred_region
      _
    $region5: #{tpu_custom_call.1} parent=1 // pred_fallthru
      _
    // Predicated region
    $region6: #{tpu_custom_call.1} parent=1 // pred_check
      _
    $region7: #{tpu_custom_call.1} parent=1 // pred_check_branch
      %16 = sbr.rel (0) target = $region9
    $region8: #{tpu_custom_call.1} parent=1 // pred_region
      _
    $region9: #{tpu_custom_call.1} parent=1 // pred_fallthru
      _
    // Predicated region
    $region10: #{tpu_custom_call.1} parent=1 // pred_check
      _
    $region11: #{tpu_custom_call.1} parent=1 // pred_check_branch
      %18 = sbr.rel (0) target = $region13
    $region12: #{tpu_custom_call.1} parent=1 // pred_region
      _
    $region13: #{tpu_custom_call.1} parent=1 // pred_fallthru
      _
    // Predicated region
    $region14: #{tpu_custom_call.1} parent=1 // pred_check
      _
    $region15: #{tpu_custom_call.1} parent=1 // pred_check_branch
      %20 = sbr.rel (0) target = $region17
    $region16: #{tpu_custom_call.1} parent=1 // pred_region
      _
    $region17: #{tpu_custom_call.1} parent=1 // pred_fallthru
      _
    // Predicated region
    $region18: #{tpu_custom_call.1} parent=1 // pred_check
      _
    $region19: #{tpu_custom_call.1} parent=1 // pred_check_branch
      %22 = sbr.rel (0) target = $region21
    $region20: #{tpu_custom_call.1} parent=1 // pred_region
      _
    $region21: #{tpu_custom_call.1} parent=1 // pred_fallthru
      _
    // Predicated region
    $region22: #{tpu_custom_call.1} parent=1 // pred_check
      _
    $region23: #{tpu_custom_call.1} parent=1 // pred_check_branch
      %24 = sbr.rel (0) target = $region25
    $region24: #{tpu_custom_call.1} parent=1 // pred_region
      _
    $region25: #{tpu_custom_call.1} parent=1 // pred_fallthru
      _
    // Predicated region
    $region26: #{tpu_custom_call.1} parent=1 // pred_check
      _
    $region27: #{tpu_custom_call.1} parent=1 // pred_check_branch
      %26 = sbr.rel (0) target = $region29
    $region28: #{tpu_custom_call.1} parent=1 // pred_region
      _
    $region29: #{tpu_custom_call.1} parent=1 // pred_fallthru
      _
    %v28 = vld [vmem:[%s0] sm:$0x1]
    %v29 = vld [vmem:[%s1] sm:$0xf]
    %v30 = vld [vmem:[%s1 + $0x4] sm:$0xf]
    %v31 = vld [vmem:[%s1 + $0x8] sm:$0xf]
    %v32 = vld [vmem:[%s1 + $0xc] sm:$0xf]
    %v33 = vld [vmem:[%s1 + $0x10] sm:$0xf]
    %v34 = vld [vmem:[%s1 + $0x14] sm:$0xf]
    %v35 = vld [vmem:[%s1 + $0x18] sm:$0xf]
    %v36 = vld [vmem:[%s1 + $0x1c] sm:$0xf]
    %v37 = vld [vmem:[%s2] sm:$0x1]
    %v39 = vlaneseq
    %v40 = vshrl.u32 %v39, 7
    %v41 = vsub.s32 0, %v40
    %v42 = vrot.slane %v37, %v41
    %v52 = vunpack.c.l.b16 %v29
    %v53 = vunpack.c.l.b16 %v30
    %v54 = vunpack.c.l.b16 %v31
    %v55 = vunpack.c.l.b16 %v32
    %v56 = vunpack.c.l.b16 %v33
    %v57 = vunpack.c.l.b16 %v34
    %v58 = vunpack.c.l.b16 %v35
    %v59 = vunpack.c.l.b16 %v36
    %v60 = vpack.c.b16 %v53, %v52
    %v61 = vpack.c.b16 %v55, %v54
    %v62 = vpack.c.b16 %v57, %v56
    %v63 = vpack.c.b16 %v59, %v58
    %vm68 = vcmask 523264
    %v70 = vsel %vm68, %v28, 0
    %72 = vmatprep.subr.bf16.mxu0 0
    %73 = vmatpush1.bf16.msra.mxu0 %v60
    %74 = vmatprep.subr.bf16.mxu0 0
    %75 = vmatpush1.bf16.msra.mxu0 %v61
    %76 = vmatprep.subr.bf16.mxu0 0
    %77 = vmatpush1.bf16.msra.mxu0 %v62
    %78 = vmatprep.subr.bf16.mxu0 0
    %79 = vmatpush1.bf16.msra.mxu0 %v63
    %80 = vmatprep.subr.bf16.mxu0 0
    %81 = vmatpush1.bf16.msra.mxu0 0
    %82 = vmatprep.subr.bf16.mxu0 0
    %83 = vmatpush1.bf16.msra.mxu0 0
    %84 = vmatprep.subr.bf16.mxu0 0
    %85 = vmatpush1.bf16.msra.mxu0 0
    %86 = vmatprep.subr.bf16.mxu0 0
    %87 = vmatpush1.bf16.msra.mxu0 0
    %88 = vmatprep.subr.bf16.mxu0 0
    %89 = vmatpush1.bf16.msra.mxu0 0
    %90 = vmatprep.subr.bf16.mxu0 0
    %91 = vmatpush1.bf16.msra.mxu0 0
    %92 = vmatprep.subr.bf16.mxu0 0
    %93 = vmatpush1.bf16.msra.mxu0 0
    %94 = vmatprep.subr.bf16.mxu0 0
    %95 = vmatpush1.bf16.msra.mxu0 0
    %96 = vmatprep.subr.bf16.mxu0 0
    %97 = vmatpush1.bf16.msra.mxu0 0
    %98 = vmatprep.subr.bf16.mxu0 0
    %99 = vmatpush1.bf16.msra.mxu0 0
    %100 = vmatprep.subr.bf16.mxu0 0
    %101 = vmatpush1.bf16.msra.mxu0 0
    %102 = vmatprep.subr.bf16.mxu0 0
    %103 = vmatpush1.bf16.msra.mxu0 0
    %104 = vmatprep.mubr.bf16.mxu0 0
    %105 = vmatmul.mubr.bf16.gmra.mrb[0].mxu0 %v70
    %v106 = vpop.f32.mrb[0].mxu0
    %v107 = vadd.f32 %v42, %v106
    %v108 = vpop.f32.mrb[0].mxu0
    %v109 = vpop.f32.mrb[0].mxu0
    %v110 = vpop.f32.mrb[0].mxu0
    %111 = vdwg.mxu0
    %v112 = vmax.f32 %v107, 0.0
    %v113 = vpack.c.bf16 %v112, %v112
    %v114 = vld [vmem:[%s3] sm:$0xf]
    %v115 = vld [vmem:[%s3 + $0x4] sm:$0xf]
    %v116 = vld [vmem:[%s3 + $0x8] sm:$0xf]
    %v117 = vld [vmem:[%s3 + $0xc] sm:$0xf]
    %v118 = vld [vmem:[%s4] sm:$0x1]
    %v120 = vlaneseq
    %v121 = vshrl.u32 %v120, 7
    %v122 = vsub.s32 0, %v121
    %v123 = vrot.slane %v118, %v122
    %v129 = vunpack.c.l.b16 %v114
    %v130 = vunpack.c.l.b16 %v115
    %v131 = vunpack.c.l.b16 %v116
    %v132 = vunpack.c.l.b16 %v117
    %v133 = vpack.c.b16 %v130, %v129
    %v134 = vpack.c.b16 %v132, %v131
    %vm137 = vcmask 261120
    %v139 = vsel %vm137, %v113, 0
    %141 = vmatprep.subr.bf16.mxu0 0
    %142 = vmatpush1.bf16.msra.mxu0 %v133
    %143 = vmatprep.subr.bf16.mxu0 0
    %144 = vmatpush1.bf16.msra.mxu0 %v134
    %145 = vmatprep.subr.bf16.mxu0 0
    %146 = vmatpush1.bf16.msra.mxu0 0
    %147 = vmatprep.subr.bf16.mxu0 0
    %148 = vmatpush1.bf16.msra.mxu0 0
    %149 = vmatprep.subr.bf16.mxu0 0
    %150 = vmatpush1.bf16.msra.mxu0 0
    %151 = vmatprep.subr.bf16.mxu0 0
    %152 = vmatpush1.bf16.msra.mxu0 0
    %153 = vmatprep.subr.bf16.mxu0 0
    %154 = vmatpush1.bf16.msra.mxu0 0
    %155 = vmatprep.subr.bf16.mxu0 0
    %156 = vmatpush1.bf16.msra.mxu0 0
    %157 = vmatprep.subr.bf16.mxu0 0
    %158 = vmatpush1.bf16.msra.mxu0 0
    %159 = vmatprep.subr.bf16.mxu0 0
    %160 = vmatpush1.bf16.msra.mxu0 0
    %161 = vmatprep.subr.bf16.mxu0 0
    %162 = vmatpush1.bf16.msra.mxu0 0
    %163 = vmatprep.subr.bf16.mxu0 0
    %164 = vmatpush1.bf16.msra.mxu0 0
    %165 = vmatprep.subr.bf16.mxu0 0
    %166 = vmatpush1.bf16.msra.mxu0 0
    %167 = vmatprep.subr.bf16.mxu0 0
    %168 = vmatpush1.bf16.msra.mxu0 0
    %169 = vmatprep.subr.bf16.mxu0 0
    %170 = vmatpush1.bf16.msra.mxu0 0
    %171 = vmatprep.subr.bf16.mxu0 0
    %172 = vmatpush1.bf16.msra.mxu0 0
    %173 = vmatprep.mubr.bf16.mxu0 0
    %174 = vmatmul.mubr.bf16.gmra.mrb[0].mxu0 %v139
    %v175 = vpop.f32.mrb[0].mxu0
    %v176 = vadd.f32 %v123, %v175
    %v177 = vpop.f32.mrb[0].mxu0
    %v178 = vpop.f32.mrb[0].mxu0
    %v179 = vpop.f32.mrb[0].mxu0
    %180 = vdwg.mxu0
    %v181 = vmax.f32 %v176, 0.0
    %v182 = vpack.c.bf16 %v181, %v181
    %v183 = vld [vmem:[%s5] sm:$0xf]
    %v184 = vld [vmem:[%s5 + $0x4] sm:$0xf]
    %v185 = vld [vmem:[%s5 + $0x8] sm:$0xf]
    %v186 = vld [vmem:[%s5 + $0xc] sm:$0xf]
    %v187 = vld [vmem:[%s6] sm:$0x1]
    %v189 = vlaneseq
    %v190 = vshrl.u32 %v189, 7
    %v191 = vsub.s32 0, %v190
    %v192 = vrot.slane %v187, %v191
    %v198 = vunpack.c.l.b16 %v183
    %v199 = vunpack.c.l.b16 %v184
    %v200 = vunpack.c.l.b16 %v185
    %v201 = vunpack.c.l.b16 %v186
    %v202 = vpack.c.b16 %v199, %v198
    %v203 = vpack.c.b16 %v201, %v200
    %v207 = vsel %vm137, %v182, 0
    %209 = vmatprep.subr.bf16.mxu0 0
    %210 = vmatpush1.bf16.msra.mxu0 %v202
    %211 = vmatprep.subr.bf16.mxu0 0
    %212 = vmatpush1.bf16.msra.mxu0 %v203
    %213 = vmatprep.subr.bf16.mxu0 0
    %214 = vmatpush1.bf16.msra.mxu0 0
    %215 = vmatprep.subr.bf16.mxu0 0
    %216 = vmatpush1.bf16.msra.mxu0 0
    %217 = vmatprep.subr.bf16.mxu0 0
    %218 = vmatpush1.bf16.msra.mxu0 0
    %219 = vmatprep.subr.bf16.mxu0 0
    %220 = vmatpush1.bf16.msra.mxu0 0
    %221 = vmatprep.subr.bf16.mxu0 0
    %222 = vmatpush1.bf16.msra.mxu0 0
    %223 = vmatprep.subr.bf16.mxu0 0
    %224 = vmatpush1.bf16.msra.mxu0 0
    %225 = vmatprep.subr.bf16.mxu0 0
    %226 = vmatpush1.bf16.msra.mxu0 0
    %227 = vmatprep.subr.bf16.mxu0 0
    %228 = vmatpush1.bf16.msra.mxu0 0
    %229 = vmatprep.subr.bf16.mxu0 0
    %230 = vmatpush1.bf16.msra.mxu0 0
    %231 = vmatprep.subr.bf16.mxu0 0
    %232 = vmatpush1.bf16.msra.mxu0 0
    %233 = vmatprep.subr.bf16.mxu0 0
    %234 = vmatpush1.bf16.msra.mxu0 0
    %235 = vmatprep.subr.bf16.mxu0 0
    %236 = vmatpush1.bf16.msra.mxu0 0
    %237 = vmatprep.subr.bf16.mxu0 0
    %238 = vmatpush1.bf16.msra.mxu0 0
    %239 = vmatprep.subr.bf16.mxu0 0
    %240 = vmatpush1.bf16.msra.mxu0 0
    %241 = vmatprep.mubr.bf16.mxu0 0
    %242 = vmatmul.mubr.bf16.gmra.mrb[0].mxu0 %v207
    %v243 = vpop.f32.mrb[0].mxu0
    %v244 = vadd.f32 %v192, %v243
    %v245 = vpop.f32.mrb[0].mxu0
    %v246 = vpop.f32.mrb[0].mxu0
    %v247 = vpop.f32.mrb[0].mxu0
    %248 = vdwg.mxu0
    %vm249 = vcmask 58368
    %250 = vst.msk [vmem:[#allocation2] sm:$0x3] %vm249, %v244
    // Predicated region
    $region30: #{tpu_custom_call.1} parent=1 // pred_check
      _
    $region31: #{tpu_custom_call.1} parent=1 // pred_check_branch
      %252 = sbr.rel (0) target = $region33
    $region32: #{tpu_custom_call.1} parent=1 // pred_region
      %s254 = ssub.s32 32, 32
      %255 = vsyncadd [#allocation3], %s254
      %s257 = sshll.u32 [#allocation2], 4
      %s258 = int_to_ptr.vmem [resolvable:$true] %s257
      %260 = dma.vmem_to_hbm [thread:$0]  %s258, 32, %s7, [#allocation3]
    $region33: #{tpu_custom_call.1} parent=1 // pred_fallthru
      _
    // Predicated region
    $region34: #{tpu_custom_call.1} parent=1 // pred_check
      _
    $region35: #{tpu_custom_call.1} parent=1 // pred_check_branch
      %262 = sbr.rel (0) target = $region37
    $region36: #{tpu_custom_call.1} parent=1 // pred_region
      %263 = dma.done [#allocation3], 32
    $region37: #{tpu_custom_call.1} parent=1 // pred_fallthru
      _
    %264 = vsyncpa [#allocation3], 1

</llo_original>
